<compile_context>
chip_gen: v7x
topology: tpu7x:2x2x1
jax: 0.10.0
libtpu: 0.0.40
codegen_flags: <defaults>
</compile_context>

<pallas_src>
import jax
import jax.numpy as jnp
from jax import lax
from jax.experimental import pallas as pl
from jax.experimental.pallas import tpu as pltpu

IN_FEATURES = 8 * 8 * 5   # 320
HIDDEN = 64
OUT_FEATURES = 10


def _mlp_tanh_kernel(x_ref, w1_ref, b1_ref, w23t_ref, b23_ref, o_ref):
    # Cast the tile in VMEM (matches x.to(torch.float)); the HBM DMA stays in
    # the caller's dtype.
    x = x_ref[...].astype(jnp.float32)                                  # (TM, 320)
    h1 = jnp.tanh(
        jnp.dot(x, w1_ref[...], preferred_element_type=jnp.float32) + b1_ref[...]
    )                                                                   # (TM, 64)
    # Fused layers 2+3, computed transposed so the tile's M dim lands on lanes:
    #   o^T = tanh(W23^T @ h1^T + b23)   -> (10, TM), lane-dense store.
    ot = lax.dot_general(
        w23t_ref[...], h1,
        dimension_numbers=(((1,), (1,)), ((), ())),
        preferred_element_type=jnp.float32,
    )                                                                   # (10, TM)
    o_ref[...] = jnp.tanh(ot + b23_ref[...])


def _choose_tm(m):
    """Row-tile size.

    The transposed output puts M on the lane axis, so TM must be a multiple
    of 128 unless it covers the whole array.  Target >= 4 tiles (keeps both
    v7x TensorCores busy and the DMA pipeline double-buffered), cap at 2048
    rows (~5.5 MiB double-buffered VMEM footprint).
    """
    if m <= 128:
        return m
    tm = (m // (4 * 128)) * 128
    return max(128, min(2048, tm))


def model_tanh_forward(x, params):
    """x: (B, S, 8, 8, 5) any real dtype. Returns (B, S, 10) float32."""
    w1, b1, w2, b2, w3, b3 = params
    B, S = x.shape[0], x.shape[1]
    xm = x.reshape(B * S, IN_FEATURES)       # Flatten(start_dim=2) + collapse (B,S)
    M = xm.shape[0]

    # Offline weight prep (tiny): transpose layer-1, fuse layers 2+3.
    #   x @ W2^T @ W3^T == x @ (W3 @ W2)^T
    w1t = w1.T.astype(jnp.float32)                                        # (320, 64)
    w23t = (w3 @ w2).astype(jnp.float32)                                  # (10, 64)
    b23 = (b2 @ w3.T + b3).astype(jnp.float32).reshape(OUT_FEATURES, 1)   # (10, 1)
    b1r = b1.astype(jnp.float32).reshape(1, HIDDEN)                       # (1, 64)

    TM = _choose_tm(M)
    n_tiles = pl.cdiv(M, TM)   # ragged last block: Pallas masks OOB rows/cols

    out_t = pl.pallas_call(
        _mlp_tanh_kernel,
        out_shape=jax.ShapeDtypeStruct((OUT_FEATURES, M), jnp.float32),
        grid=(n_tiles,),
        in_specs=[
            pl.BlockSpec((TM, IN_FEATURES), lambda i: (i, 0)),       # x tile
            pl.BlockSpec((IN_FEATURES, HIDDEN), lambda i: (0, 0)),   # W1^T
            pl.BlockSpec((1, HIDDEN), lambda i: (0, 0)),             # b1
            pl.BlockSpec((OUT_FEATURES, HIDDEN), lambda i: (0, 0)),  # fused W23^T
            pl.BlockSpec((OUT_FEATURES, 1), lambda i: (0, 0)),       # fused b23
        ],
        out_specs=pl.BlockSpec((OUT_FEATURES, TM), lambda i: (0, i)),
        compiler_params=pltpu.CompilerParams(
            dimension_semantics=("parallel",),   # megacore sharding on v7x
        ),
    )(xm, w1t, b1r, w23t, b23)

    # Narrow (10, M) output: the transpose back reads/writes only 40 B/row,
    # negligible next to the 1280 B/row input stream (and fuses under jit).
    return out_t.T.reshape(B, S, OUT_FEATURES)


def init_params(key):
    """Deterministic params, PyTorch nn.Linear-style uniform(+-1/sqrt(fan_in))."""
    ks = jax.random.split(key, 6)

    def linear(kw, kb, fan_in, fan_out):
        bound = 1.0 / jnp.sqrt(jnp.float32(fan_in))
        w = jax.random.uniform(kw, (fan_out, fan_in), jnp.float32, -bound, bound)
        b = jax.random.uniform(kb, (fan_out,), jnp.float32, -bound, bound)
        return w, b

    w1, b1 = linear(ks[0], ks[1], IN_FEATURES, HIDDEN)
    w2, b2 = linear(ks[2], ks[3], HIDDEN, HIDDEN)
    w3, b3 = linear(ks[4], ks[5], HIDDEN, OUT_FEATURES)
    return (w1, b1, w2, b2, w3, b3)


def _reference(x, params):
    w1, b1, w2, b2, w3, b3 = params
    B, S = x.shape[0], x.shape[1]
    xr = x.astype(jnp.float32).reshape(B, S, -1)
    h = jnp.tanh(xr @ w1.T + b1)
    h = h @ w2.T + b2
    return jnp.tanh(h @ w3.T + b3)


if __name__ == "__main__":
    key = jax.random.PRNGKey(0)
    kx, kx2, kp = jax.random.split(key, 3)
    params = init_params(kp)
    fwd = jax.jit(model_tanh_forward)

    # Case 1: small shape, single full tile (B=2, S=4 -> M=8).
    x = jax.random.normal(kx, (2, 4, 8, 8, 5), dtype=jnp.float32)
    y = jax.block_until_ready(fwd(x, params))
    ref = _reference(x, params)
    assert y.shape == (2, 4, OUT_FEATURES)
    assert jnp.allclose(y, ref, atol=1e-4, rtol=1e-4), float(jnp.max(jnp.abs(y - ref)))

    # Case 2: multi-tile grid with a ragged last block (B=5, S=60 -> M=300,
    # TM=128 -> 3 tiles, last tile 44 valid rows).
    x2 = jax.random.normal(kx2, (5, 60, 8, 8, 5), dtype=jnp.float32)
    y2 = jax.block_until_ready(fwd(x2, params))
    ref2 = _reference(x2, params)
    assert y2.shape == (5, 60, OUT_FEATURES)
    assert jnp.allclose(y2, ref2, atol=1e-4, rtol=1e-4), float(jnp.max(jnp.abs(y2 - ref2)))

    print("KERNEL_OK")
</pallas_src>

<mosaic_0001>
module attributes {stable_mosaic.version = 11 : i64} {
  func.func @_mlp_tanh_kernel(%arg0: i32, %arg1: memref<8x320xf32, #tpu.memory_space<vmem>>, %arg2: memref<320x64xf32, #tpu.memory_space<vmem>>, %arg3: memref<1x64xf32, #tpu.memory_space<vmem>>, %arg4: memref<10x64xf32, #tpu.memory_space<vmem>>, %arg5: memref<10x1xf32, #tpu.memory_space<vmem>>, %arg6: memref<10x8xf32, #tpu.memory_space<vmem>>) attributes {dimension_semantics = [#tpu.dimension_semantics<parallel>], iteration_bounds = array<i64: 1>, scalar_prefetch = 0 : i64, scratch_operands = 0 : i64, tpu.core_type = #tpu.core_type<tc>, window_params = [{transform_indices = @transform_0, window_bounds = array<i64: 8, 320>}, {pipeline_mode = #tpu.pipeline_mode<synchronous>, transform_indices = @transform_1, window_bounds = array<i64: 320, 64>}, {pipeline_mode = #tpu.pipeline_mode<synchronous>, transform_indices = @transform_2, window_bounds = array<i64: 1, 64>}, {pipeline_mode = #tpu.pipeline_mode<synchronous>, transform_indices = @transform_3, window_bounds = array<i64: 10, 64>}, {pipeline_mode = #tpu.pipeline_mode<synchronous>, transform_indices = @transform_4, window_bounds = array<i64: 10, 1>}, {transform_indices = @transform_5, window_bounds = array<i64: 10, 8>}]} {
    %c0 = arith.constant 0 : index
    %c0_0 = arith.constant 0 : index
    %0 = vector.load %arg1[%c0, %c0_0] : memref<8x320xf32, #tpu.memory_space<vmem>>, vector<8x320xf32>
    %c0_1 = arith.constant 0 : index
    %c0_2 = arith.constant 0 : index
    %1 = vector.load %arg2[%c0_1, %c0_2] : memref<320x64xf32, #tpu.memory_space<vmem>>, vector<320x64xf32>
    %cst = arith.constant dense<0.000000e+00> : vector<8x64xf32>
    %2 = tpu.matmul %0, %1, %cst {dimension_numbers = #tpu.dot_dimension_numbers<[1], [0], [0], [1], [0, 0, 1, 1], [], []>} : vector<8x320xf32>, vector<320x64xf32>, vector<8x64xf32> -> vector<8x64xf32>
    %c0_3 = arith.constant 0 : index
    %c0_4 = arith.constant 0 : index
    %3 = vector.load %arg3[%c0_3, %c0_4] : memref<1x64xf32, #tpu.memory_space<vmem>>, vector<1x64xf32>
    %4 = vector.broadcast %3 : vector<1x64xf32> to vector<8x64xf32>
    %5 = arith.addf %2, %4 : vector<8x64xf32>
    %6 = math.tanh %5 : vector<8x64xf32>
    %c0_5 = arith.constant 0 : index
    %c0_6 = arith.constant 0 : index
    %7 = vector.load %arg4[%c0_5, %c0_6] : memref<10x64xf32, #tpu.memory_space<vmem>>, vector<10x64xf32>
    %cst_7 = arith.constant dense<0.000000e+00> : vector<10x8xf32>
    %8 = tpu.matmul %7, %6, %cst_7 {dimension_numbers = #tpu.dot_dimension_numbers<[1], [1], [0], [0], [0, 0, 1, 0], [], []>} : vector<10x64xf32>, vector<8x64xf32>, vector<10x8xf32> -> vector<10x8xf32>
    %c0_8 = arith.constant 0 : index
    %c0_9 = arith.constant 0 : index
    %9 = vector.load %arg5[%c0_8, %c0_9] : memref<10x1xf32, #tpu.memory_space<vmem>>, vector<10x1xf32>
    %10 = vector.broadcast %9 : vector<10x1xf32> to vector<10x8xf32>
    %11 = arith.addf %8, %10 : vector<10x8xf32>
    %12 = math.tanh %11 : vector<10x8xf32>
    %c0_10 = arith.constant 0 : index
    %c0_11 = arith.constant 0 : index
    %13 = vector.load %arg6[%c0_10, %c0_11] : memref<10x8xf32, #tpu.memory_space<vmem>>, vector<10x8xf32>
    tpu.vector_store %arg6[%c0_10, %c0_11], %12 {strides = array<i32>} : memref<10x8xf32, #tpu.memory_space<vmem>>, vector<10x8xf32>,
    return
  }
  func.func @transform_0(%arg0: i32) -> (i32, i32) {
    %c0_i32 = arith.constant 0 : i32
    %c0_i32_0 = arith.constant 0 : i32
    return %arg0, %c0_i32 : i32, i32
  }
  func.func @transform_1(%arg0: i32) -> (i32, i32) {
    %c0_i32 = arith.constant 0 : i32
    %c0_i32_0 = arith.constant 0 : i32
    %c0_i32_1 = arith.constant 0 : i32
    return %c0_i32, %c0_i32_0 : i32, i32
  }
  func.func @transform_2(%arg0: i32) -> (i32, i32) {
    %c0_i32 = arith.constant 0 : i32
    %c0_i32_0 = arith.constant 0 : i32
    %c0_i32_1 = arith.constant 0 : i32
    return %c0_i32, %c0_i32_0 : i32, i32
  }
  func.func @transform_3(%arg0: i32) -> (i32, i32) {
    %c0_i32 = arith.constant 0 : i32
    %c0_i32_0 = arith.constant 0 : i32
    %c0_i32_1 = arith.constant 0 : i32
    return %c0_i32, %c0_i32_0 : i32, i32
  }
  func.func @transform_4(%arg0: i32) -> (i32, i32) {
    %c0_i32 = arith.constant 0 : i32
    %c0_i32_0 = arith.constant 0 : i32
    %c0_i32_1 = arith.constant 0 : i32
    return %c0_i32, %c0_i32_0 : i32, i32
  }
  func.func @transform_5(%arg0: i32) -> (i32, i32) {
    %c0_i32 = arith.constant 0 : i32
    %c0_i32_0 = arith.constant 0 : i32
    return %c0_i32, %arg0 : i32, i32
  }
}

</mosaic_0001>

<llo_original>
// kernel: model_tanh_forward.1
$region0: #{model_tanh_forward.1}
  #allocation0 [shape = 'u32[]', space=smem, size = 0x4, offset = 0x4, fixed_abs, tag = 'smem constant byte address 0x4 - core index']
  #allocation1 [shape = 'u32[144,128]{1,0:T(1,128)}', space=vmem, size = 0x12000, scoped, tag = 'internal scratch']
  %s0 = inlined_call_operand.vmem [shape: f32[8,320], index: 0, kind: input, shape index: {}]
  %s1 = inlined_call_operand.vmem [shape: f32[320,64], index: 1, kind: input, shape index: {}]
  %s2 = inlined_call_operand.vmem [shape: f32[1,64], index: 2, kind: input, shape index: {}]
  %s3 = inlined_call_operand.vmem [shape: f32[10,64], index: 3, kind: input, shape index: {}]
  %s4 = inlined_call_operand.vmem [shape: f32[10,1], index: 4, kind: input, shape index: {}]
  %s5 = inlined_call_operand.vmem [shape: f32[10,8], index: 5, kind: output, shape index: {}]
  %s6 = sld [smem:[#allocation0]]
  $region30: #{model_tanh_forward.1} parent=0
    _
  %s8 = ssub.s32 1, %s6
  %s9 = scalar_select 0, %s8, %s6
  // Predicated region
  $region2: #{model_tanh_forward.1} parent=0 // pred_check
    _
  $region3: #{model_tanh_forward.1} parent=0 // pred_check_branch
    %11 = sbr.rel (0) target = $region5
  $region4: #{model_tanh_forward.1} parent=0 // pred_region
    _
  $region5: #{model_tanh_forward.1} parent=0 // pred_fallthru
    _
  // Predicated region
  $region6: #{model_tanh_forward.1} parent=0 // pred_check
    _
  $region7: #{model_tanh_forward.1} parent=0 // pred_check_branch
    %13 = sbr.rel (0) target = $region9
  $region8: #{model_tanh_forward.1} parent=0 // pred_region
    _
  $region9: #{model_tanh_forward.1} parent=0 // pred_fallthru
    _
  // Predicated region
  $region10: #{model_tanh_forward.1} parent=0 // pred_check
    _
  $region11: #{model_tanh_forward.1} parent=0 // pred_check_branch
    %15 = sbr.rel (0) target = $region13
  $region12: #{model_tanh_forward.1} parent=0 // pred_region
    _
  $region13: #{model_tanh_forward.1} parent=0 // pred_fallthru
    _
  // Predicated region
  $region14: #{model_tanh_forward.1} parent=0 // pred_check
    _
  $region15: #{model_tanh_forward.1} parent=0 // pred_check_branch
    %17 = sbr.rel (0) target = $region17
  $region16: #{model_tanh_forward.1} parent=0 // pred_region
    _
  $region17: #{model_tanh_forward.1} parent=0 // pred_fallthru
    _
  // Predicated region
  $region18: #{model_tanh_forward.1} parent=0 // pred_check
    _
  $region19: #{model_tanh_forward.1} parent=0 // pred_check_branch
    %19 = sbr.rel (0) target = $region21
  $region20: #{model_tanh_forward.1} parent=0 // pred_region
    _
  $region21: #{model_tanh_forward.1} parent=0 // pred_fallthru
    _
  %v20 = vld [vmem:[%s0] sm:$0xff]
  %v21 = vld [vmem:[%s0 + $0x8] sm:$0xff]
  %v22 = vld [vmem:[%s0 + $0x10] sm:$0xff]
  %v23 = vld [vmem:[%s1] sm:$0xff]
  %v24 = vld [vmem:[%s1 + $0x8] sm:$0xff]
  %v25 = vld [vmem:[%s1 + $0x10] sm:$0xff]
  %v26 = vld [vmem:[%s1 + $0x18] sm:$0xff]
  %v27 = vld [vmem:[%s1 + $0x20] sm:$0xff]
  %v28 = vld [vmem:[%s1 + $0x28] sm:$0xff]
  %v29 = vld [vmem:[%s1 + $0x30] sm:$0xff]
  %v30 = vld [vmem:[%s1 + $0x38] sm:$0xff]
  %v31 = vld [vmem:[%s1 + $0x40] sm:$0xff]
  %v32 = vld [vmem:[%s1 + $0x48] sm:$0xff]
  %v33 = vld [vmem:[%s1 + $0x50] sm:$0xff]
  %v34 = vld [vmem:[%s1 + $0x58] sm:$0xff]
  %v35 = vld [vmem:[%s1 + $0x60] sm:$0xff]
  %v36 = vld [vmem:[%s1 + $0x68] sm:$0xff]
  %v37 = vld [vmem:[%s1 + $0x70] sm:$0xff]
  %v38 = vld [vmem:[%s1 + $0x78] sm:$0xff]
  %v39 = vld [vmem:[%s1 + $0x80] sm:$0xff]
  %v40 = vld [vmem:[%s1 + $0x88] sm:$0xff]
  %v41 = vld [vmem:[%s1 + $0x90] sm:$0xff]
  %v42 = vld [vmem:[%s1 + $0x98] sm:$0xff]
  %v43 = vld [vmem:[%s1 + $0xa0] sm:$0xff]
  %v44 = vld [vmem:[%s1 + $0xa8] sm:$0xff]
  %v45 = vld [vmem:[%s1 + $0xb0] sm:$0xff]
  %v46 = vld [vmem:[%s1 + $0xb8] sm:$0xff]
  %v47 = vld [vmem:[%s1 + $0xc0] sm:$0xff]
  %v48 = vld [vmem:[%s1 + $0xc8] sm:$0xff]
  %v49 = vld [vmem:[%s1 + $0xd0] sm:$0xff]
  %v50 = vld [vmem:[%s1 + $0xd8] sm:$0xff]
  %v51 = vld [vmem:[%s1 + $0xe0] sm:$0xff]
  %v52 = vld [vmem:[%s1 + $0xe8] sm:$0xff]
  %v53 = vld [vmem:[%s1 + $0xf0] sm:$0xff]
  %v54 = vld [vmem:[%s1 + $0xf8] sm:$0xff]
  %v55 = vld [vmem:[%s1 + $0x100] sm:$0xff]
  %v56 = vld [vmem:[%s1 + $0x108] sm:$0xff]
  %v57 = vld [vmem:[%s1 + $0x110] sm:$0xff]
  %v58 = vld [vmem:[%s1 + $0x118] sm:$0xff]
  %v59 = vld [vmem:[%s1 + $0x120] sm:$0xff]
  %v60 = vld [vmem:[%s1 + $0x128] sm:$0xff]
  %v61 = vld [vmem:[%s1 + $0x130] sm:$0xff]
  %v62 = vld [vmem:[%s1 + $0x138] sm:$0xff]
  %v63 = vld [vmem:[%s2] sm:$0x1]
  %v65 = vlaneseq
  %v66 = vshrl.u32 %v65, 7
  %v67 = vsub.s32 0, %v66
  %v68 = vrot.slane %v63, %v67
  %vm70 = vcmask 523264
  %v72 = vsel %vm70, %v22, 0
  %74 = vmatprep.subr.mxu0 0.0
  %75 = vmatpush1.msra.mxu0 %v23
  %76 = vmatprep.subr.mxu0 0.0
  %77 = vmatpush1.msra.mxu0 %v24
  %78 = vmatprep.subr.mxu0 0.0
  %79 = vmatpush1.msra.mxu0 %v25
  %80 = vmatprep.subr.mxu0 0.0
  %81 = vmatpush1.msra.mxu0 %v26
  %82 = vmatprep.subr.mxu0 0.0
  %83 = vmatpush1.msra.mxu0 %v27
  %84 = vmatprep.subr.mxu0 0.0
  %85 = vmatpush1.msra.mxu0 %v28
  %86 = vmatprep.subr.mxu0 0.0
  %87 = vmatpush1.msra.mxu0 %v29
  %88 = vmatprep.subr.mxu0 0.0
  %89 = vmatpush1.msra.mxu0 %v30
  %90 = vmatprep.subr.mxu0 0.0
  %91 = vmatpush1.msra.mxu0 %v31
  %92 = vmatprep.subr.mxu0 0.0
  %93 = vmatpush1.msra.mxu0 %v32
  %94 = vmatprep.subr.mxu0 0.0
  %95 = vmatpush1.msra.mxu0 %v33
  %96 = vmatprep.subr.mxu0 0.0
  %97 = vmatpush1.msra.mxu0 %v34
  %98 = vmatprep.subr.mxu0 0.0
  %99 = vmatpush1.msra.mxu0 %v35
  %100 = vmatprep.subr.mxu0 0.0
  %101 = vmatpush1.msra.mxu0 %v36
  %102 = vmatprep.subr.mxu0 0.0
  %103 = vmatpush1.msra.mxu0 %v37
  %104 = vmatprep.subr.mxu0 0.0
  %105 = vmatpush1.msra.mxu0 %v38
  %106 = vmatprep.subr.mxu0 0.0
  %107 = vmatpush1.msra.mxu0 %v39
  %108 = vmatprep.subr.mxu0 0.0
  %109 = vmatpush1.msra.mxu0 %v40
  %110 = vmatprep.subr.mxu0 0.0
  %111 = vmatpush1.msra.mxu0 %v41
  %112 = vmatprep.subr.mxu0 0.0
  %113 = vmatpush1.msra.mxu0 %v42
  %114 = vmatprep.subr.mxu0 0.0
  %115 = vmatpush1.msra.mxu0 %v43
  %116 = vmatprep.subr.mxu0 0.0
  %117 = vmatpush1.msra.mxu0 %v44
  %118 = vmatprep.subr.mxu0 0.0
  %119 = vmatpush1.msra.mxu0 %v45
  %120 = vmatprep.subr.mxu0 0.0
  %121 = vmatpush1.msra.mxu0 %v46
  %122 = vmatprep.subr.mxu0 0.0
  %123 = vmatpush1.msra.mxu0 %v47
  %124 = vmatprep.subr.mxu0 0.0
  %125 = vmatpush1.msra.mxu0 %v48
  %126 = vmatprep.subr.mxu0 0.0
  %127 = vmatpush1.msra.mxu0 %v49
  %128 = vmatprep.subr.mxu0 0.0
  %129 = vmatpush1.msra.mxu0 %v50
  %130 = vmatprep.subr.mxu0 0.0
  %131 = vmatpush1.msra.mxu0 %v51
  %132 = vmatprep.subr.mxu0 0.0
  %133 = vmatpush1.msra.mxu0 %v52
  %134 = vmatprep.subr.mxu0 0.0
  %135 = vmatpush1.msra.mxu0 %v53
  %136 = vmatprep.subr.mxu0 0.0
  %137 = vmatpush1.msra.mxu0 %v54
  %138 = vmatprep.mubr.f32.mxu0 %v21
  %139 = vmatmul.mubr.f32.gmra.mrb[0].mxu0 %v20
  %v140 = vpop.f32.mrb[0].mxu0
  %v141 = vadd.f32 %v68, %v140
  %v142 = vpop.f32.mrb[0].mxu0
  %143 = vdwg.mxu0
  %144 = vmatprep.subr.mxu0 0.0
  %145 = vmatpush1.msra.mxu0 %v55
  %146 = vmatprep.subr.mxu0 0.0
  %147 = vmatpush1.msra.mxu0 %v56
  %148 = vmatprep.subr.mxu0 0.0
  %149 = vmatpush1.msra.mxu0 %v57
  %150 = vmatprep.subr.mxu0 0.0
  %151 = vmatpush1.msra.mxu0 %v58
  %152 = vmatprep.subr.mxu0 0.0
  %153 = vmatpush1.msra.mxu0 %v59
  %154 = vmatprep.subr.mxu0 0.0
  %155 = vmatpush1.msra.mxu0 %v60
  %156 = vmatprep.subr.mxu0 0.0
  %157 = vmatpush1.msra.mxu0 %v61
  %158 = vmatprep.subr.mxu0 0.0
  %159 = vmatpush1.msra.mxu0 %v62
  %160 = vmatprep.subr.mxu0 0.0
  %161 = vmatpush1.msra.mxu0 0.0
  %162 = vmatprep.subr.mxu0 0.0
  %163 = vmatpush1.msra.mxu0 0.0
  %164 = vmatprep.subr.mxu0 0.0
  %165 = vmatpush1.msra.mxu0 0.0
  %166 = vmatprep.subr.mxu0 0.0
  %167 = vmatpush1.msra.mxu0 0.0
  %168 = vmatprep.subr.mxu0 0.0
  %169 = vmatpush1.msra.mxu0 0.0
  %170 = vmatprep.subr.mxu0 0.0
  %171 = vmatpush1.msra.mxu0 0.0
  %172 = vmatprep.subr.mxu0 0.0
  %173 = vmatpush1.msra.mxu0 0.0
  %174 = vmatprep.subr.mxu0 0.0
  %175 = vmatpush1.msra.mxu0 0.0
  %176 = vmatprep.subr.mxu0 0.0
  %177 = vmatpush1.msra.mxu0 0.0
  %178 = vmatprep.subr.mxu0 0.0
  %179 = vmatpush1.msra.mxu0 0.0
  %180 = vmatprep.subr.mxu0 0.0
  %181 = vmatpush1.msra.mxu0 0.0
  %182 = vmatprep.subr.mxu0 0.0
  %183 = vmatpush1.msra.mxu0 0.0
  %184 = vmatprep.subr.mxu0 0.0
  %185 = vmatpush1.msra.mxu0 0.0
  %186 = vmatprep.subr.mxu0 0.0
  %187 = vmatpush1.msra.mxu0 0.0
  %188 = vmatprep.subr.mxu0 0.0
  %189 = vmatpush1.msra.mxu0 0.0
  %190 = vmatprep.subr.mxu0 0.0
  %191 = vmatpush1.msra.mxu0 0.0
  %192 = vmatprep.subr.mxu0 0.0
  %193 = vmatpush1.msra.mxu0 0.0
  %194 = vmatprep.subr.mxu0 0.0
  %195 = vmatpush1.msra.mxu0 0.0
  %196 = vmatprep.subr.mxu0 0.0
  %197 = vmatpush1.msra.mxu0 0.0
  %198 = vmatprep.subr.mxu0 0.0
  %199 = vmatpush1.msra.mxu0 0.0
  %200 = vmatprep.subr.mxu0 0.0
  %201 = vmatpush1.msra.mxu0 0.0
  %202 = vmatprep.subr.mxu0 0.0
  %203 = vmatpush1.msra.mxu0 0.0
  %204 = vmatprep.subr.mxu0 0.0
  %205 = vmatpush1.msra.mxu0 0.0
  %206 = vmatprep.subr.mxu0 0.0
  %207 = vmatpush1.msra.mxu0 0.0
  %208 = vmatprep.mubr.f32.mxu0 0.0
  %209 = vmatmul.mubr.f32.gmra.mrb[0].mxu0 %v72
  %v210 = vpop.f32.mrb[0].mxu0
  %v211 = vadd.f32 %v141, %v210
  %v212 = vpop.f32.mrb[0].mxu0
  %213 = vdwg.mxu0
  %v214 = vtanh.pop %v211
  %v215 = vld [vmem:[%s3] sm:$0xff]
  %v216 = vld [vmem:[%s3 + $0x8] sm:$0x3]
  %v217 = vld [vmem:[%s4] sm:$0xff]
  %v218 = vld [vmem:[%s4 + $0x8] sm:$0x3]
  %220 = vset.pattern.permute.xlu0 0
  %221 = vperm.xlu0 %220, %v217
  %v222 = vpop.permute.xlu0 %221
  %225 = vset.pattern.permute.xlu0 0
  %226 = vperm.xlu0 %225, %v218
  %v227 = vpop.permute.xlu0 %226
  %v230 = vsel %vm70, %v215, 0
  %v233 = vsel %vm70, %v216, 0
  %v236 = vsel %vm70, %v214, 0
  %238 = vmatprep.subr.mxu0 0.0
  %239 = vmatpush1.xpose.msra.mxu0 %v236
  %240 = vmatprep.subr.mxu0 0.0
  %241 = vmatpush1.xpose.msra.mxu0 0.0
  %242 = vmatprep.subr.mxu0 0.0
  %243 = vmatpush1.xpose.msra.mxu0 0.0
  %244 = vmatprep.subr.mxu0 0.0
  %245 = vmatpush1.xpose.msra.mxu0 0.0
  %246 = vmatprep.subr.mxu0 0.0
  %247 = vmatpush1.xpose.msra.mxu0 0.0
  %248 = vmatprep.subr.mxu0 0.0
  %249 = vmatpush1.xpose.msra.mxu0 0.0
  %250 = vmatprep.subr.mxu0 0.0
  %251 = vmatpush1.xpose.msra.mxu0 0.0
  %252 = vmatprep.subr.mxu0 0.0
  %253 = vmatpush1.xpose.msra.mxu0 0.0
  %254 = vmatprep.subr.mxu0 0.0
  %255 = vmatpush1.xpose.msra.mxu0 0.0
  %256 = vmatprep.subr.mxu0 0.0
  %257 = vmatpush1.xpose.msra.mxu0 0.0
  %258 = vmatprep.subr.mxu0 0.0
  %259 = vmatpush1.xpose.msra.mxu0 0.0
  %260 = vmatprep.subr.mxu0 0.0
  %261 = vmatpush1.xpose.msra.mxu0 0.0
  %262 = vmatprep.subr.mxu0 0.0
  %263 = vmatpush1.xpose.msra.mxu0 0.0
  %264 = vmatprep.subr.mxu0 0.0
  %265 = vmatpush1.xpose.msra.mxu0 0.0
  %266 = vmatprep.subr.mxu0 0.0
  %267 = vmatpush1.xpose.msra.mxu0 0.0
  %268 = vmatprep.subr.mxu0 0.0
  %269 = vmatpush1.xpose.msra.mxu0 0.0
  %270 = vmatprep.subr.mxu0 0.0
  %271 = vmatpush1.xpose.msra.mxu0 0.0
  %272 = vmatprep.subr.mxu0 0.0
  %273 = vmatpush1.xpose.msra.mxu0 0.0
  %274 = vmatprep.subr.mxu0 0.0
  %275 = vmatpush1.xpose.msra.mxu0 0.0
  %276 = vmatprep.subr.mxu0 0.0
  %277 = vmatpush1.xpose.msra.mxu0 0.0
  %278 = vmatprep.subr.mxu0 0.0
  %279 = vmatpush1.xpose.msra.mxu0 0.0
  %280 = vmatprep.subr.mxu0 0.0
  %281 = vmatpush1.xpose.msra.mxu0 0.0
  %282 = vmatprep.subr.mxu0 0.0
  %283 = vmatpush1.xpose.msra.mxu0 0.0
  %284 = vmatprep.subr.mxu0 0.0
  %285 = vmatpush1.xpose.msra.mxu0 0.0
  %286 = vmatprep.subr.mxu0 0.0
  %287 = vmatpush1.xpose.msra.mxu0 0.0
  %288 = vmatprep.subr.mxu0 0.0
  %289 = vmatpush1.xpose.msra.mxu0 0.0
  %290 = vmatprep.subr.mxu0 0.0
  %291 = vmatpush1.xpose.msra.mxu0 0.0
  %292 = vmatprep.subr.mxu0 0.0
  %293 = vmatpush1.xpose.msra.mxu0 0.0
  %294 = vmatprep.subr.mxu0 0.0
  %295 = vmatpush1.xpose.msra.mxu0 0.0
  %296 = vmatprep.subr.mxu0 0.0
  %297 = vmatpush1.xpose.msra.mxu0 0.0
  %298 = vmatprep.subr.mxu0 0.0
  %299 = vmatpush1.xpose.msra.mxu0 0.0
  %300 = vmatprep.subr.mxu0 0.0
  %301 = vmatpush1.xpose.msra.mxu0 0.0
  %302 = vmatprep.mubr.f32.mxu0 0.0
  %303 = vmatmul.mubr.f32.gmra.mrb[0].mxu0 %v230
  %v304 = vpop.f32.mrb[0].mxu0
  %v305 = vadd.f32 %v222, %v304
  %v306 = vpop.f32.mrb[0].mxu0
  %307 = vmatprep.mubr.f32.mxu0 0.0
  %308 = vmatmul.mubr.f32.gmra.mrb[0].mxu0 %v233
  %v309 = vpop.f32.mrb[0].mxu0
  %v310 = vadd.f32 %v227, %v309
  %v311 = vpop.f32.mrb[0].mxu0
  %312 = vdwg.mxu0
  %v313 = vtanh.pop %v305
  %v314 = vtanh.pop %v310
  %vm315 = vcmask 64512
  %316 = vst.msk [vmem:[%s5] sm:$0xff] %vm315, %v313
  %vm317 = vcmask 58368
  %318 = vst.msk [vmem:[%s5 + $0x8] sm:$0x3] %vm317, %v314
  // Predicated region
  $region22: #{model_tanh_forward.1} parent=0 // pred_check
    _
  $region23: #{model_tanh_forward.1} parent=0 // pred_check_branch
    %320 = sbr.rel (0) target = $region25
  $region24: #{model_tanh_forward.1} parent=0 // pred_region
    _
  $region25: #{model_tanh_forward.1} parent=0 // pred_fallthru
    _
  // Predicated region
  $region26: #{model_tanh_forward.1} parent=0 // pred_check
    _
  $region27: #{model_tanh_forward.1} parent=0 // pred_check_branch
    %322 = sbr.rel (0) target = $region29
  $region28: #{model_tanh_forward.1} parent=0 // pred_region
    _
  $region29: #{model_tanh_forward.1} parent=0 // pred_fallthru
    _

</llo_original>
